<compile_context>
chip_gen: v7x
topology: tpu7x:2x2x1
jax: 0.10.0
libtpu: 0.0.40
codegen_flags: <defaults>
</compile_context>

<pallas_src>
import jax
import jax.numpy as jnp
from jax.experimental import pallas as pl
from jax.experimental.pallas import tpu as pltpu


# ----------------------------- fused Pallas kernel -----------------------------

def make_fused_kernel(num_prot, n_total, half, num_layers):
    def kernel(*refs):
        (starts_ref, ends_ref, invlen_ref,
         e1d_ref, gat_ref,
         pm_w_ref, pm_b_ref,
         pre_w_ref, pre_b_ref) = refs[:9]
        combo_refs = [refs[9 + 4 * l: 13 + 4 * l] for l in range(num_layers)]
        proj_w_ref, proj_b_ref, o_ref = refs[9 + 4 * num_layers:]

        # --- per-protein segment mean of GAT outputs (mean commutes with the
        #     affine preReadout, so we average first on the small [B, half] side).
        ridx = jax.lax.broadcasted_iota(jnp.int32, (num_prot, n_total), 1)
        mask = (ridx >= starts_ref[...]) & (ridx < ends_ref[...])          # [B, N]
        onehot = mask.astype(jnp.float32).astype(jnp.bfloat16)
        seg_mean = (jnp.dot(onehot, gat_ref[...],
                            preferred_element_type=jnp.float32)
                    * invlen_ref[...])                                     # [B, half] f32

        # --- preReadout linear (applied to the already-averaged rows)
        gat_read = (jnp.dot(seg_mean.astype(jnp.bfloat16), pre_w_ref[...],
                            preferred_element_type=jnp.float32)
                    + pre_b_ref[...])                                      # [B, half]

        # --- postMean linear on the ESM 1D embeddings
        mean_out = (jnp.dot(e1d_ref[...], pm_w_ref[...],
                            preferred_element_type=jnp.float32)
                    + pm_b_ref[...])                                       # [B, half]

        # --- postCombination blocks: Linear -> LeakyReLU(0.01) -> LayerNorm(1e-5)
        #     Layer 0 consumes concat([mean_out, gat_read]) implicitly by
        #     splitting its weight matrix along the input axis.
        x = None
        for l in range(num_layers):
            w_ref, b_ref, g_ref, beta_ref = combo_refs[l]
            if l == 0:
                y = (jnp.dot(mean_out.astype(jnp.bfloat16), w_ref[:half, :],
                             preferred_element_type=jnp.float32)
                     + jnp.dot(gat_read.astype(jnp.bfloat16), w_ref[half:, :],
                               preferred_element_type=jnp.float32)
                     + b_ref[...])
            else:
                y = (jnp.dot(x.astype(jnp.bfloat16), w_ref[...],
                             preferred_element_type=jnp.float32)
                     + b_ref[...])
            y = jnp.where(y >= 0, y, 0.01 * y)                 # LeakyReLU(0.01)
            mu = jnp.mean(y, axis=-1, keepdims=True)
            var = jnp.mean((y - mu) ** 2, axis=-1, keepdims=True)
            x = (y - mu) * jax.lax.rsqrt(var + 1e-5) * g_ref[...] + beta_ref[...]

        # --- projection (only HBM writeback of the whole fused chain)
        o_ref[...] = (jnp.dot(x.astype(jnp.bfloat16), proj_w_ref[...],
                              preferred_element_type=jnp.float32)
                      + proj_b_ref[...])
    return kernel


# ------------------------------ wrapper ------------------------------

def fused_forward(embed1D, gat_out, starts, ends, inv_lens,
                  pre_w, pre_b, pm_w, pm_b, combo_params, proj_w, proj_b):
    num_prot = embed1D.shape[0]
    n_total, half = gat_out.shape
    proj_dims = proj_w.shape[1]
    num_layers = len(combo_params)

    # bf16 for all MXU operands; biases / LayerNorm affine params stay f32.
    inputs = [starts, ends, inv_lens,
              embed1D.astype(jnp.bfloat16),
              gat_out.astype(jnp.bfloat16),
              pm_w.astype(jnp.bfloat16), pm_b,
              pre_w.astype(jnp.bfloat16), pre_b]
    for (w, b, g, beta) in combo_params:
        inputs += [w.astype(jnp.bfloat16), b, g, beta]
    inputs += [proj_w.astype(jnp.bfloat16), proj_b]

    kernel = make_fused_kernel(num_prot, n_total, half, num_layers)
    in_specs = [pl.BlockSpec(a.shape, lambda i: (0, 0)) for a in inputs]

    return pl.pallas_call(
        kernel,
        grid=(1,),
        in_specs=in_specs,
        out_specs=pl.BlockSpec((num_prot, proj_dims), lambda i: (0, 0)),
        out_shape=jax.ShapeDtypeStruct((num_prot, proj_dims), jnp.float32),
        compiler_params=pltpu.CompilerParams(dimension_semantics=("arbitrary",)),
    )(*inputs)


# -------------------------- pure-JAX (f32) reference --------------------------

def reference_forward(embed1D, gat_out, seqlens, pre_w, pre_b, pm_w, pm_b,
                      combo_params, proj_w, proj_b):
    gat_readable = gat_out @ pre_w + pre_b                      # preReadout
    reads, off = [], 0
    for l in seqlens:
        reads.append(jnp.mean(gat_readable[off:off + l], axis=0))
        off += l
    gat_read = jnp.stack(reads, axis=0)
    mean_out = embed1D @ pm_w + pm_b                            # postMean
    x = jnp.concatenate([mean_out, gat_read], axis=1)
    for (w, bb, g, beta) in combo_params:                       # postCombination
        y = x @ w + bb
        y = jnp.where(y >= 0, y, 0.01 * y)
        mu = jnp.mean(y, axis=-1, keepdims=True)
        var = jnp.mean((y - mu) ** 2, axis=-1, keepdims=True)
        x = (y - mu) / jnp.sqrt(var + 1e-5) * g + beta
    return x @ proj_w + proj_b                                  # projection


# ------------------------------- main -------------------------------

if __name__ == "__main__":
    key = jax.random.PRNGKey(0)

    # hyper (small, but consistent with the module)
    postcomb_dim = 64
    postcomb_layers = 2
    proj_dims = 16
    half = postcomb_dim // 2          # 32 = GAT out_channels = preReadout dims
    esm_dim = 480

    num_prot = 2
    seqlens = [8, 8]
    n_total = sum(seqlens)

    keys = jax.random.split(key, 16)

    # synthetic upstream tensors (stand-ins for ESM embedder / GAT outputs)
    embed1D = jax.random.normal(keys[0], (num_prot, esm_dim), jnp.float32)
    gat_out = jax.random.normal(keys[1], (n_total, half), jnp.float32)

    # per-protein segment metadata (host-side; 1/len precomputed, zero-len guarded)
    starts = jnp.array([[sum(seqlens[:i])] for i in range(num_prot)], jnp.int32)
    ends = jnp.array([[sum(seqlens[:i + 1])] for i in range(num_prot)], jnp.int32)
    inv_lens = jnp.array([[1.0 / max(l, 1)] for l in seqlens], jnp.float32)

    def lin_params(k, din, dout):
        kw, kb = jax.random.split(k)
        w_t = jax.random.normal(kw, (din, dout), jnp.float32) * 0.05
        b = jax.random.normal(kb, (1, dout), jnp.float32) * 0.05
        return w_t, b

    pre_w, pre_b = lin_params(keys[2], half, half)          # preReadout
    pm_w, pm_b = lin_params(keys[3], esm_dim, half)         # postMean
    combo_params = []
    for l in range(postcomb_layers):                        # postCombination
        w, bb = lin_params(keys[4 + l], postcomb_dim, postcomb_dim)
        kg, kbeta = jax.random.split(keys[8 + l])
        g = 1.0 + 0.05 * jax.random.normal(kg, (1, postcomb_dim), jnp.float32)
        beta = 0.05 * jax.random.normal(kbeta, (1, postcomb_dim), jnp.float32)
        combo_params.append((w, bb, g, beta))
    proj_w, proj_b = lin_params(keys[12], postcomb_dim, proj_dims)   # projection

    # ---- fused Pallas forward (single dispatch under jit) ----
    fused = jax.jit(fused_forward)
    projected = fused(embed1D, gat_out, starts, ends, inv_lens,
                      pre_w, pre_b, pm_w, pm_b, combo_params, proj_w, proj_b)
    projected = jax.block_until_ready(projected)

    # ---- correctness check vs pure-f32 reference ----
    ref = reference_forward(embed1D, gat_out, seqlens, pre_w, pre_b, pm_w, pm_b,
                            combo_params, proj_w, proj_b)
    assert projected.shape == (num_prot, proj_dims)
    # bf16 MXU operands (f32 accumulation) => looser tolerance than pure-f32 path.
    assert jnp.allclose(projected, ref, rtol=2e-2, atol=3e-2), "mismatch vs reference"

    print("KERNEL_OK")
</pallas_src>

<mosaic_0001>
module attributes {stable_mosaic.version = 11 : i64} {
  func.func @kernel(%arg0: i32, %arg1: memref<2x1xi32, #tpu.memory_space<vmem>>, %arg2: memref<2x1xi32, #tpu.memory_space<vmem>>, %arg3: memref<2x1xf32, #tpu.memory_space<vmem>>, %arg4: memref<2x480xbf16, #tpu.memory_space<vmem>>, %arg5: memref<16x32xbf16, #tpu.memory_space<vmem>>, %arg6: memref<480x32xbf16, #tpu.memory_space<vmem>>, %arg7: memref<1x32xf32, #tpu.memory_space<vmem>>, %arg8: memref<32x32xbf16, #tpu.memory_space<vmem>>, %arg9: memref<1x32xf32, #tpu.memory_space<vmem>>, %arg10: memref<64x64xbf16, #tpu.memory_space<vmem>>, %arg11: memref<1x64xf32, #tpu.memory_space<vmem>>, %arg12: memref<1x64xf32, #tpu.memory_space<vmem>>, %arg13: memref<1x64xf32, #tpu.memory_space<vmem>>, %arg14: memref<64x64xbf16, #tpu.memory_space<vmem>>, %arg15: memref<1x64xf32, #tpu.memory_space<vmem>>, %arg16: memref<1x64xf32, #tpu.memory_space<vmem>>, %arg17: memref<1x64xf32, #tpu.memory_space<vmem>>, %arg18: memref<64x16xbf16, #tpu.memory_space<vmem>>, %arg19: memref<1x16xf32, #tpu.memory_space<vmem>>, %arg20: memref<2x16xf32, #tpu.memory_space<vmem>>) attributes {dimension_semantics = [#tpu.dimension_semantics<arbitrary>], iteration_bounds = array<i64: 1>, scalar_prefetch = 0 : i64, scratch_operands = 0 : i64, tpu.core_type = #tpu.core_type<tc>, window_params = [{pipeline_mode = #tpu.pipeline_mode<synchronous>, transform_indices = @transform_0, window_bounds = array<i64: 2, 1>}, {pipeline_mode = #tpu.pipeline_mode<synchronous>, transform_indices = @transform_1, window_bounds = array<i64: 2, 1>}, {pipeline_mode = #tpu.pipeline_mode<synchronous>, transform_indices = @transform_2, window_bounds = array<i64: 2, 1>}, {pipeline_mode = #tpu.pipeline_mode<synchronous>, transform_indices = @transform_3, window_bounds = array<i64: 2, 480>}, {pipeline_mode = #tpu.pipeline_mode<synchronous>, transform_indices = @transform_4, window_bounds = array<i64: 16, 32>}, {pipeline_mode = #tpu.pipeline_mode<synchronous>, transform_indices = @transform_5, window_bounds = array<i64: 480, 32>}, {pipeline_mode = #tpu.pipeline_mode<synchronous>, transform_indices = @transform_6, window_bounds = array<i64: 1, 32>}, {pipeline_mode = #tpu.pipeline_mode<synchronous>, transform_indices = @transform_7, window_bounds = array<i64: 32, 32>}, {pipeline_mode = #tpu.pipeline_mode<synchronous>, transform_indices = @transform_8, window_bounds = array<i64: 1, 32>}, {pipeline_mode = #tpu.pipeline_mode<synchronous>, transform_indices = @transform_9, window_bounds = array<i64: 64, 64>}, {pipeline_mode = #tpu.pipeline_mode<synchronous>, transform_indices = @transform_10, window_bounds = array<i64: 1, 64>}, {pipeline_mode = #tpu.pipeline_mode<synchronous>, transform_indices = @transform_11, window_bounds = array<i64: 1, 64>}, {pipeline_mode = #tpu.pipeline_mode<synchronous>, transform_indices = @transform_12, window_bounds = array<i64: 1, 64>}, {pipeline_mode = #tpu.pipeline_mode<synchronous>, transform_indices = @transform_13, window_bounds = array<i64: 64, 64>}, {pipeline_mode = #tpu.pipeline_mode<synchronous>, transform_indices = @transform_14, window_bounds = array<i64: 1, 64>}, {pipeline_mode = #tpu.pipeline_mode<synchronous>, transform_indices = @transform_15, window_bounds = array<i64: 1, 64>}, {pipeline_mode = #tpu.pipeline_mode<synchronous>, transform_indices = @transform_16, window_bounds = array<i64: 1, 64>}, {pipeline_mode = #tpu.pipeline_mode<synchronous>, transform_indices = @transform_17, window_bounds = array<i64: 64, 16>}, {pipeline_mode = #tpu.pipeline_mode<synchronous>, transform_indices = @transform_18, window_bounds = array<i64: 1, 16>}, {pipeline_mode = #tpu.pipeline_mode<synchronous>, transform_indices = @transform_19, window_bounds = array<i64: 2, 16>}]} {
    %0 = tpu.iota {dimensions = array<i32: 1>} : vector<2x16xi32>
    %c0 = arith.constant 0 : index
    %c0_0 = arith.constant 0 : index
    %1 = vector.load %arg1[%c0, %c0_0] : memref<2x1xi32, #tpu.memory_space<vmem>>, vector<2x1xi32>
    %2 = vector.broadcast %1 : vector<2x1xi32> to vector<2x16xi32>
    %3 = arith.cmpi sge, %0, %2 : vector<2x16xi32>
    %c0_1 = arith.constant 0 : index
    %c0_2 = arith.constant 0 : index
    %4 = vector.load %arg2[%c0_1, %c0_2] : memref<2x1xi32, #tpu.memory_space<vmem>>, vector<2x1xi32>
    %5 = vector.broadcast %4 : vector<2x1xi32> to vector<2x16xi32>
    %6 = arith.cmpi slt, %0, %5 : vector<2x16xi32>
    %7 = arith.andi %3, %6 : vector<2x16xi1>
    %8 = arith.extui %7 : vector<2x16xi1> to vector<2x16xi32>
    %9 = arith.sitofp %8 : vector<2x16xi32> to vector<2x16xf32>
    %10 = arith.truncf %9 : vector<2x16xf32> to vector<2x16xbf16>
    %c0_3 = arith.constant 0 : index
    %c0_4 = arith.constant 0 : index
    %11 = vector.load %arg5[%c0_3, %c0_4] : memref<16x32xbf16, #tpu.memory_space<vmem>>, vector<16x32xbf16>
    %cst = arith.constant dense<0.000000e+00> : vector<2x32xf32>
    %12 = tpu.matmul %10, %11, %cst {dimension_numbers = #tpu.dot_dimension_numbers<[1], [0], [0], [1], [0, 0, 1, 1], [], []>} : vector<2x16xbf16>, vector<16x32xbf16>, vector<2x32xf32> -> vector<2x32xf32>
    %c0_5 = arith.constant 0 : index
    %c0_6 = arith.constant 0 : index
    %13 = vector.load %arg3[%c0_5, %c0_6] : memref<2x1xf32, #tpu.memory_space<vmem>>, vector<2x1xf32>
    %14 = vector.broadcast %13 : vector<2x1xf32> to vector<2x32xf32>
    %15 = arith.mulf %12, %14 : vector<2x32xf32>
    %16 = arith.truncf %15 : vector<2x32xf32> to vector<2x32xbf16>
    %c0_7 = arith.constant 0 : index
    %c0_8 = arith.constant 0 : index
    %17 = vector.load %arg8[%c0_7, %c0_8] : memref<32x32xbf16, #tpu.memory_space<vmem>>, vector<32x32xbf16>
    %cst_9 = arith.constant dense<0.000000e+00> : vector<2x32xf32>
    %18 = tpu.matmul %16, %17, %cst_9 {dimension_numbers = #tpu.dot_dimension_numbers<[1], [0], [0], [1], [0, 0, 1, 1], [], []>} : vector<2x32xbf16>, vector<32x32xbf16>, vector<2x32xf32> -> vector<2x32xf32>
    %c0_10 = arith.constant 0 : index
    %c0_11 = arith.constant 0 : index
    %19 = vector.load %arg9[%c0_10, %c0_11] : memref<1x32xf32, #tpu.memory_space<vmem>>, vector<1x32xf32>
    %20 = vector.broadcast %19 : vector<1x32xf32> to vector<2x32xf32>
    %21 = arith.addf %18, %20 : vector<2x32xf32>
    %c0_12 = arith.constant 0 : index
    %c0_13 = arith.constant 0 : index
    %22 = vector.load %arg4[%c0_12, %c0_13] : memref<2x480xbf16, #tpu.memory_space<vmem>>, vector<2x480xbf16>
    %c0_14 = arith.constant 0 : index
    %c0_15 = arith.constant 0 : index
    %23 = vector.load %arg6[%c0_14, %c0_15] : memref<480x32xbf16, #tpu.memory_space<vmem>>, vector<480x32xbf16>
    %cst_16 = arith.constant dense<0.000000e+00> : vector<2x32xf32>
    %24 = tpu.matmul %22, %23, %cst_16 {dimension_numbers = #tpu.dot_dimension_numbers<[1], [0], [0], [1], [0, 0, 1, 1], [], []>} : vector<2x480xbf16>, vector<480x32xbf16>, vector<2x32xf32> -> vector<2x32xf32>
    %c0_17 = arith.constant 0 : index
    %c0_18 = arith.constant 0 : index
    %25 = vector.load %arg7[%c0_17, %c0_18] : memref<1x32xf32, #tpu.memory_space<vmem>>, vector<1x32xf32>
    %26 = vector.broadcast %25 : vector<1x32xf32> to vector<2x32xf32>
    %27 = arith.addf %24, %26 : vector<2x32xf32>
    %28 = arith.truncf %27 : vector<2x32xf32> to vector<2x32xbf16>
    %c0_19 = arith.constant 0 : index
    %c0_20 = arith.constant 0 : index
    %29 = vector.load %arg10[%c0_19, %c0_20] : memref<64x64xbf16, #tpu.memory_space<vmem>>, vector<32x64xbf16>
    %cst_21 = arith.constant dense<0.000000e+00> : vector<2x64xf32>
    %30 = tpu.matmul %28, %29, %cst_21 {dimension_numbers = #tpu.dot_dimension_numbers<[1], [0], [0], [1], [0, 0, 1, 1], [], []>} : vector<2x32xbf16>, vector<32x64xbf16>, vector<2x64xf32> -> vector<2x64xf32>
    %31 = arith.truncf %21 : vector<2x32xf32> to vector<2x32xbf16>
    %c32 = arith.constant 32 : index
    %c0_22 = arith.constant 0 : index
    %32 = vector.load %arg10[%c32, %c0_22] : memref<64x64xbf16, #tpu.memory_space<vmem>>, vector<32x64xbf16>
    %cst_23 = arith.constant dense<0.000000e+00> : vector<2x64xf32>
    %33 = tpu.matmul %31, %32, %cst_23 {dimension_numbers = #tpu.dot_dimension_numbers<[1], [0], [0], [1], [0, 0, 1, 1], [], []>} : vector<2x32xbf16>, vector<32x64xbf16>, vector<2x64xf32> -> vector<2x64xf32>
    %34 = arith.addf %30, %33 : vector<2x64xf32>
    %c0_24 = arith.constant 0 : index
    %c0_25 = arith.constant 0 : index
    %35 = vector.load %arg11[%c0_24, %c0_25] : memref<1x64xf32, #tpu.memory_space<vmem>>, vector<1x64xf32>
    %36 = vector.broadcast %35 : vector<1x64xf32> to vector<2x64xf32>
    %37 = arith.addf %34, %36 : vector<2x64xf32>
    %cst_26 = arith.constant 0.000000e+00 : f32
    %38 = vector.broadcast %cst_26 : f32 to vector<2x64xf32>
    %39 = arith.cmpf oge, %37, %38 : vector<2x64xf32>
    %cst_27 = arith.constant 0.00999999977 : f32
    %40 = vector.broadcast %cst_27 : f32 to vector<2x64xf32>
    %41 = arith.mulf %40, %37 : vector<2x64xf32>
    %42 = arith.select %39, %37, %41 : vector<2x64xi1>, vector<2x64xf32>
    %cst_28 = arith.constant dense<0.000000e+00> : vector<2xf32>
    %43 = vector.multi_reduction <add>, %42, %cst_28 [1] : vector<2x64xf32> to vector<2xf32>
    %44 = vector.shape_cast %43 : vector<2xf32> to vector<2x1xf32>
    %cst_29 = arith.constant 6.400000e+01 : f32
    %45 = vector.broadcast %cst_29 : f32 to vector<2x1xf32>
    %46 = arith.divf %44, %45 : vector<2x1xf32>
    %47 = vector.broadcast %46 : vector<2x1xf32> to vector<2x64xf32>
    %48 = arith.subf %42, %47 : vector<2x64xf32>
    %49 = arith.mulf %48, %48 : vector<2x64xf32>
    %cst_30 = arith.constant dense<0.000000e+00> : vector<2xf32>
    %50 = vector.multi_reduction <add>, %49, %cst_30 [1] : vector<2x64xf32> to vector<2xf32>
    %51 = vector.shape_cast %50 : vector<2xf32> to vector<2x1xf32>
    %cst_31 = arith.constant 6.400000e+01 : f32
    %52 = vector.broadcast %cst_31 : f32 to vector<2x1xf32>
    %53 = arith.divf %51, %52 : vector<2x1xf32>
    %54 = vector.broadcast %46 : vector<2x1xf32> to vector<2x64xf32>
    %55 = arith.subf %42, %54 : vector<2x64xf32>
    %cst_32 = arith.constant 9.99999974E-6 : f32
    %56 = vector.broadcast %cst_32 : f32 to vector<2x1xf32>
    %57 = arith.addf %53, %56 : vector<2x1xf32>
    %58 = math.rsqrt %57 : vector<2x1xf32>
    %59 = vector.broadcast %58 : vector<2x1xf32> to vector<2x64xf32>
    %60 = arith.mulf %55, %59 : vector<2x64xf32>
    %c0_33 = arith.constant 0 : index
    %c0_34 = arith.constant 0 : index
    %61 = vector.load %arg12[%c0_33, %c0_34] : memref<1x64xf32, #tpu.memory_space<vmem>>, vector<1x64xf32>
    %62 = vector.broadcast %61 : vector<1x64xf32> to vector<2x64xf32>
    %63 = arith.mulf %60, %62 : vector<2x64xf32>
    %c0_35 = arith.constant 0 : index
    %c0_36 = arith.constant 0 : index
    %64 = vector.load %arg13[%c0_35, %c0_36] : memref<1x64xf32, #tpu.memory_space<vmem>>, vector<1x64xf32>
    %65 = vector.broadcast %64 : vector<1x64xf32> to vector<2x64xf32>
    %66 = arith.addf %63, %65 : vector<2x64xf32>
    %67 = arith.truncf %66 : vector<2x64xf32> to vector<2x64xbf16>
    %c0_37 = arith.constant 0 : index
    %c0_38 = arith.constant 0 : index
    %68 = vector.load %arg14[%c0_37, %c0_38] : memref<64x64xbf16, #tpu.memory_space<vmem>>, vector<64x64xbf16>
    %cst_39 = arith.constant dense<0.000000e+00> : vector<2x64xf32>
    %69 = tpu.matmul %67, %68, %cst_39 {dimension_numbers = #tpu.dot_dimension_numbers<[1], [0], [0], [1], [0, 0, 1, 1], [], []>} : vector<2x64xbf16>, vector<64x64xbf16>, vector<2x64xf32> -> vector<2x64xf32>
    %c0_40 = arith.constant 0 : index
    %c0_41 = arith.constant 0 : index
    %70 = vector.load %arg15[%c0_40, %c0_41] : memref<1x64xf32, #tpu.memory_space<vmem>>, vector<1x64xf32>
    %71 = vector.broadcast %70 : vector<1x64xf32> to vector<2x64xf32>
    %72 = arith.addf %69, %71 : vector<2x64xf32>
    %cst_42 = arith.constant 0.000000e+00 : f32
    %73 = vector.broadcast %cst_42 : f32 to vector<2x64xf32>
    %74 = arith.cmpf oge, %72, %73 : vector<2x64xf32>
    %cst_43 = arith.constant 0.00999999977 : f32
    %75 = vector.broadcast %cst_43 : f32 to vector<2x64xf32>
    %76 = arith.mulf %75, %72 : vector<2x64xf32>
    %77 = arith.select %74, %72, %76 : vector<2x64xi1>, vector<2x64xf32>
    %cst_44 = arith.constant dense<0.000000e+00> : vector<2xf32>
    %78 = vector.multi_reduction <add>, %77, %cst_44 [1] : vector<2x64xf32> to vector<2xf32>
    %79 = vector.shape_cast %78 : vector<2xf32> to vector<2x1xf32>
    %cst_45 = arith.constant 6.400000e+01 : f32
    %80 = vector.broadcast %cst_45 : f32 to vector<2x1xf32>
    %81 = arith.divf %79, %80 : vector<2x1xf32>
    %82 = vector.broadcast %81 : vector<2x1xf32> to vector<2x64xf32>
    %83 = arith.subf %77, %82 : vector<2x64xf32>
    %84 = arith.mulf %83, %83 : vector<2x64xf32>
    %cst_46 = arith.constant dense<0.000000e+00> : vector<2xf32>
    %85 = vector.multi_reduction <add>, %84, %cst_46 [1] : vector<2x64xf32> to vector<2xf32>
    %86 = vector.shape_cast %85 : vector<2xf32> to vector<2x1xf32>
    %cst_47 = arith.constant 6.400000e+01 : f32
    %87 = vector.broadcast %cst_47 : f32 to vector<2x1xf32>
    %88 = arith.divf %86, %87 : vector<2x1xf32>
    %89 = vector.broadcast %81 : vector<2x1xf32> to vector<2x64xf32>
    %90 = arith.subf %77, %89 : vector<2x64xf32>
    %cst_48 = arith.constant 9.99999974E-6 : f32
    %91 = vector.broadcast %cst_48 : f32 to vector<2x1xf32>
    %92 = arith.addf %88, %91 : vector<2x1xf32>
    %93 = math.rsqrt %92 : vector<2x1xf32>
    %94 = vector.broadcast %93 : vector<2x1xf32> to vector<2x64xf32>
    %95 = arith.mulf %90, %94 : vector<2x64xf32>
    %c0_49 = arith.constant 0 : index
    %c0_50 = arith.constant 0 : index
    %96 = vector.load %arg16[%c0_49, %c0_50] : memref<1x64xf32, #tpu.memory_space<vmem>>, vector<1x64xf32>
    %97 = vector.broadcast %96 : vector<1x64xf32> to vector<2x64xf32>
    %98 = arith.mulf %95, %97 : vector<2x64xf32>
    %c0_51 = arith.constant 0 : index
    %c0_52 = arith.constant 0 : index
    %99 = vector.load %arg17[%c0_51, %c0_52] : memref<1x64xf32, #tpu.memory_space<vmem>>, vector<1x64xf32>
    %100 = vector.broadcast %99 : vector<1x64xf32> to vector<2x64xf32>
    %101 = arith.addf %98, %100 : vector<2x64xf32>
    %102 = arith.truncf %101 : vector<2x64xf32> to vector<2x64xbf16>
    %c0_53 = arith.constant 0 : index
    %c0_54 = arith.constant 0 : index
    %103 = vector.load %arg18[%c0_53, %c0_54] : memref<64x16xbf16, #tpu.memory_space<vmem>>, vector<64x16xbf16>
    %cst_55 = arith.constant dense<0.000000e+00> : vector<2x16xf32>
    %104 = tpu.matmul %102, %103, %cst_55 {dimension_numbers = #tpu.dot_dimension_numbers<[1], [0], [0], [1], [0, 0, 1, 1], [], []>} : vector<2x64xbf16>, vector<64x16xbf16>, vector<2x16xf32> -> vector<2x16xf32>
    %c0_56 = arith.constant 0 : index
    %c0_57 = arith.constant 0 : index
    %105 = vector.load %arg19[%c0_56, %c0_57] : memref<1x16xf32, #tpu.memory_space<vmem>>, vector<1x16xf32>
    %106 = vector.broadcast %105 : vector<1x16xf32> to vector<2x16xf32>
    %107 = arith.addf %104, %106 : vector<2x16xf32>
    %c0_58 = arith.constant 0 : index
    %c0_59 = arith.constant 0 : index
    %108 = vector.load %arg20[%c0_58, %c0_59] : memref<2x16xf32, #tpu.memory_space<vmem>>, vector<2x16xf32>
    tpu.vector_store %arg20[%c0_58, %c0_59], %107 {strides = array<i32>} : memref<2x16xf32, #tpu.memory_space<vmem>>, vector<2x16xf32>,
    return
  }
  func.func @transform_0(%arg0: i32) -> (i32, i32) {
    %c0_i32 = arith.constant 0 : i32
    %c0_i32_0 = arith.constant 0 : i32
    %c0_i32_1 = arith.constant 0 : i32
    return %c0_i32, %c0_i32_0 : i32, i32
  }
  func.func @transform_1(%arg0: i32) -> (i32, i32) {
    %c0_i32 = arith.constant 0 : i32
    %c0_i32_0 = arith.constant 0 : i32
    %c0_i32_1 = arith.constant 0 : i32
    return %c0_i32, %c0_i32_0 : i32, i32
  }
  func.func @transform_2(%arg0: i32) -> (i32, i32) {
    %c0_i32 = arith.constant 0 : i32
    %c0_i32_0 = arith.constant 0 : i32
    %c0_i32_1 = arith.constant 0 : i32
    return %c0_i32, %c0_i32_0 : i32, i32
  }
  func.func @transform_3(%arg0: i32) -> (i32, i32) {
    %c0_i32 = arith.constant 0 : i32
    %c0_i32_0 = arith.constant 0 : i32
    %c0_i32_1 = arith.constant 0 : i32
    return %c0_i32, %c0_i32_0 : i32, i32
  }
  func.func @transform_4(%arg0: i32) -> (i32, i32) {
    %c0_i32 = arith.constant 0 : i32
    %c0_i32_0 = arith.constant 0 : i32
    %c0_i32_1 = arith.constant 0 : i32
    return %c0_i32, %c0_i32_0 : i32, i32
  }
  func.func @transform_5(%arg0: i32) -> (i32, i32) {
    %c0_i32 = arith.constant 0 : i32
    %c0_i32_0 = arith.constant 0 : i32
    %c0_i32_1 = arith.constant 0 : i32
    return %c0_i32, %c0_i32_0 : i32, i32
  }
  func.func @transform_6(%arg0: i32) -> (i32, i32) {
    %c0_i32 = arith.constant 0 : i32
    %c0_i32_0 = arith.constant 0 : i32
    %c0_i32_1 = arith.constant 0 : i32
    return %c0_i32, %c0_i32_0 : i32, i32
  }
  func.func @transform_7(%arg0: i32) -> (i32, i32) {
    %c0_i32 = arith.constant 0 : i32
    %c0_i32_0 = arith.constant 0 : i32
    %c0_i32_1 = arith.constant 0 : i32
    return %c0_i32, %c0_i32_0 : i32, i32
  }
  func.func @transform_8(%arg0: i32) -> (i32, i32) {
    %c0_i32 = arith.constant 0 : i32
    %c0_i32_0 = arith.constant 0 : i32
    %c0_i32_1 = arith.constant 0 : i32
    return %c0_i32, %c0_i32_0 : i32, i32
  }
  func.func @transform_9(%arg0: i32) -> (i32, i32) {
    %c0_i32 = arith.constant 0 : i32
    %c0_i32_0 = arith.constant 0 : i32
    %c0_i32_1 = arith.constant 0 : i32
    return %c0_i32, %c0_i32_0 : i32, i32
  }
  func.func @transform_10(%arg0: i32) -> (i32, i32) {
    %c0_i32 = arith.constant 0 : i32
    %c0_i32_0 = arith.constant 0 : i32
    %c0_i32_1 = arith.constant 0 : i32
    return %c0_i32, %c0_i32_0 : i32, i32
  }
  func.func @transform_11(%arg0: i32) -> (i32, i32) {
    %c0_i32 = arith.constant 0 : i32
    %c0_i32_0 = arith.constant 0 : i32
    %c0_i32_1 = arith.constant 0 : i32
    return %c0_i32, %c0_i32_0 : i32, i32
  }
  func.func @transform_12(%arg0: i32) -> (i32, i32) {
    %c0_i32 = arith.constant 0 : i32
    %c0_i32_0 = arith.constant 0 : i32
    %c0_i32_1 = arith.constant 0 : i32
    return %c0_i32, %c0_i32_0 : i32, i32
  }
  func.func @transform_13(%arg0: i32) -> (i32, i32) {
    %c0_i32 = arith.constant 0 : i32
    %c0_i32_0 = arith.constant 0 : i32
    %c0_i32_1 = arith.constant 0 : i32
    return %c0_i32, %c0_i32_0 : i32, i32
  }
  func.func @transform_14(%arg0: i32) -> (i32, i32) {
    %c0_i32 = arith.constant 0 : i32
    %c0_i32_0 = arith.constant 0 : i32
    %c0_i32_1 = arith.constant 0 : i32
    return %c0_i32, %c0_i32_0 : i32, i32
  }
  func.func @transform_15(%arg0: i32) -> (i32, i32) {
    %c0_i32 = arith.constant 0 : i32
    %c0_i32_0 = arith.constant 0 : i32
    %c0_i32_1 = arith.constant 0 : i32
    return %c0_i32, %c0_i32_0 : i32, i32
  }
  func.func @transform_16(%arg0: i32) -> (i32, i32) {
    %c0_i32 = arith.constant 0 : i32
    %c0_i32_0 = arith.constant 0 : i32
    %c0_i32_1 = arith.constant 0 : i32
    return %c0_i32, %c0_i32_0 : i32, i32
  }
  func.func @transform_17(%arg0: i32) -> (i32, i32) {
    %c0_i32 = arith.constant 0 : i32
    %c0_i32_0 = arith.constant 0 : i32
    %c0_i32_1 = arith.constant 0 : i32
    return %c0_i32, %c0_i32_0 : i32, i32
  }
  func.func @transform_18(%arg0: i32) -> (i32, i32) {
    %c0_i32 = arith.constant 0 : i32
    %c0_i32_0 = arith.constant 0 : i32
    %c0_i32_1 = arith.constant 0 : i32
    return %c0_i32, %c0_i32_0 : i32, i32
  }
  func.func @transform_19(%arg0: i32) -> (i32, i32) {
    %c0_i32 = arith.constant 0 : i32
    %c0_i32_0 = arith.constant 0 : i32
    %c0_i32_1 = arith.constant 0 : i32
    return %c0_i32, %c0_i32_0 : i32, i32
  }
}

</mosaic_0001>

<llo_original>
// kernel: fused_forward.1
$region0: #{fused_forward.1}
  #allocation0 [shape = 'u32[]', space=smem, size = 0x4, offset = 0x4, fixed_abs, tag = 'smem constant byte address 0x4 - core index']
  #allocation1 [shape = 'u32[144,128]{1,0:T(1,128)}', space=vmem, size = 0x12000, scoped, tag = 'internal scratch']
  %s0 = inlined_call_operand.vmem [shape: s32[2,1], index: 0, kind: input, shape index: {}]
  %s1 = inlined_call_operand.vmem [shape: s32[2,1], index: 1, kind: input, shape index: {}]
  %s2 = inlined_call_operand.vmem [shape: f32[2,1], index: 2, kind: input, shape index: {}]
  %s3 = inlined_call_operand.vmem [shape: bf16[2,480], index: 3, kind: input, shape index: {}]
  %s4 = inlined_call_operand.vmem [shape: bf16[16,32], index: 4, kind: input, shape index: {}]
  %s5 = inlined_call_operand.vmem [shape: bf16[480,32], index: 5, kind: input, shape index: {}]
  %s6 = inlined_call_operand.vmem [shape: f32[1,32], index: 6, kind: input, shape index: {}]
  %s7 = inlined_call_operand.vmem [shape: bf16[32,32], index: 7, kind: input, shape index: {}]
  %s8 = inlined_call_operand.vmem [shape: f32[1,32], index: 8, kind: input, shape index: {}]
  %s9 = inlined_call_operand.vmem [shape: bf16[64,64], index: 9, kind: input, shape index: {}]
  %s10 = inlined_call_operand.vmem [shape: f32[1,64], index: 10, kind: input, shape index: {}]
  %s11 = inlined_call_operand.vmem [shape: f32[1,64], index: 11, kind: input, shape index: {}]
  %s12 = inlined_call_operand.vmem [shape: f32[1,64], index: 12, kind: input, shape index: {}]
  %s13 = inlined_call_operand.vmem [shape: bf16[64,64], index: 13, kind: input, shape index: {}]
  %s14 = inlined_call_operand.vmem [shape: f32[1,64], index: 14, kind: input, shape index: {}]
  %s15 = inlined_call_operand.vmem [shape: f32[1,64], index: 15, kind: input, shape index: {}]
  %s16 = inlined_call_operand.vmem [shape: f32[1,64], index: 16, kind: input, shape index: {}]
  %s17 = inlined_call_operand.vmem [shape: bf16[64,16], index: 17, kind: input, shape index: {}]
  %s18 = inlined_call_operand.vmem [shape: f32[1,16], index: 18, kind: input, shape index: {}]
  %s19 = inlined_call_operand.hbm [shape: f32[2,16], index: 19, kind: output, shape index: {}]
  %s20 = sld [smem:[#allocation0]]
  $region86: #{fused_forward.1} parent=0
    _
  %s22 = ssub.s32 1, %s20
  %s23 = scalar_select 0, %s22, %s20
  $region1: #{fused_forward.1} parent=0
    #allocation2 [shape = 'u8[1024]{0}', space=vmem, size = 0x400, scoped, tag = 'output window, operand 0, single buffered']
    #allocation3 [shape = 's32[1]{0}', space=sflag, size = 0x4, scoped, tag = 'scoped memory for fused_forward.1']
    %24 = vsyncpa [#allocation3], 0
    // Predicated region
    $region2: #{fused_forward.1} parent=1 // pred_check
      _
    $region3: #{fused_forward.1} parent=1 // pred_check_branch
      %26 = sbr.rel (0) target = $region5
    $region4: #{fused_forward.1} parent=1 // pred_region
      _
    $region5: #{fused_forward.1} parent=1 // pred_fallthru
      _
    // Predicated region
    $region6: #{fused_forward.1} parent=1 // pred_check
      _
    $region7: #{fused_forward.1} parent=1 // pred_check_branch
      %28 = sbr.rel (0) target = $region9
    $region8: #{fused_forward.1} parent=1 // pred_region
      _
    $region9: #{fused_forward.1} parent=1 // pred_fallthru
      _
    // Predicated region
    $region10: #{fused_forward.1} parent=1 // pred_check
      _
    $region11: #{fused_forward.1} parent=1 // pred_check_branch
      %30 = sbr.rel (0) target = $region13
    $region12: #{fused_forward.1} parent=1 // pred_region
      _
    $region13: #{fused_forward.1} parent=1 // pred_fallthru
      _
    // Predicated region
    $region14: #{fused_forward.1} parent=1 // pred_check
      _
    $region15: #{fused_forward.1} parent=1 // pred_check_branch
      %32 = sbr.rel (0) target = $region17
    $region16: #{fused_forward.1} parent=1 // pred_region
      _
    $region17: #{fused_forward.1} parent=1 // pred_fallthru
      _
    // Predicated region
    $region18: #{fused_forward.1} parent=1 // pred_check
      _
    $region19: #{fused_forward.1} parent=1 // pred_check_branch
      %34 = sbr.rel (0) target = $region21
    $region20: #{fused_forward.1} parent=1 // pred_region
      _
    $region21: #{fused_forward.1} parent=1 // pred_fallthru
      _
    // Predicated region
    $region22: #{fused_forward.1} parent=1 // pred_check
      _
    $region23: #{fused_forward.1} parent=1 // pred_check_branch
      %36 = sbr.rel (0) target = $region25
    $region24: #{fused_forward.1} parent=1 // pred_region
      _
    $region25: #{fused_forward.1} parent=1 // pred_fallthru
      _
    // Predicated region
    $region26: #{fused_forward.1} parent=1 // pred_check
      _
    $region27: #{fused_forward.1} parent=1 // pred_check_branch
      %38 = sbr.rel (0) target = $region29
    $region28: #{fused_forward.1} parent=1 // pred_region
      _
    $region29: #{fused_forward.1} parent=1 // pred_fallthru
      _
    // Predicated region
    $region30: #{fused_forward.1} parent=1 // pred_check
      _
    $region31: #{fused_forward.1} parent=1 // pred_check_branch
      %40 = sbr.rel (0) target = $region33
    $region32: #{fused_forward.1} parent=1 // pred_region
      _
    $region33: #{fused_forward.1} parent=1 // pred_fallthru
      _
    // Predicated region
    $region34: #{fused_forward.1} parent=1 // pred_check
      _
    $region35: #{fused_forward.1} parent=1 // pred_check_branch
      %42 = sbr.rel (0) target = $region37
    $region36: #{fused_forward.1} parent=1 // pred_region
      _
    $region37: #{fused_forward.1} parent=1 // pred_fallthru
      _
    // Predicated region
    $region38: #{fused_forward.1} parent=1 // pred_check
      _
    $region39: #{fused_forward.1} parent=1 // pred_check_branch
      %44 = sbr.rel (0) target = $region41
    $region40: #{fused_forward.1} parent=1 // pred_region
      _
    $region41: #{fused_forward.1} parent=1 // pred_fallthru
      _
    // Predicated region
    $region42: #{fused_forward.1} parent=1 // pred_check
      _
    $region43: #{fused_forward.1} parent=1 // pred_check_branch
      %46 = sbr.rel (0) target = $region45
    $region44: #{fused_forward.1} parent=1 // pred_region
      _
    $region45: #{fused_forward.1} parent=1 // pred_fallthru
      _
    // Predicated region
    $region46: #{fused_forward.1} parent=1 // pred_check
      _
    $region47: #{fused_forward.1} parent=1 // pred_check_branch
      %48 = sbr.rel (0) target = $region49
    $region48: #{fused_forward.1} parent=1 // pred_region
      _
    $region49: #{fused_forward.1} parent=1 // pred_fallthru
      _
    // Predicated region
    $region50: #{fused_forward.1} parent=1 // pred_check
      _
    $region51: #{fused_forward.1} parent=1 // pred_check_branch
      %50 = sbr.rel (0) target = $region53
    $region52: #{fused_forward.1} parent=1 // pred_region
      _
    $region53: #{fused_forward.1} parent=1 // pred_fallthru
      _
    // Predicated region
    $region54: #{fused_forward.1} parent=1 // pred_check
      _
    $region55: #{fused_forward.1} parent=1 // pred_check_branch
      %52 = sbr.rel (0) target = $region57
    $region56: #{fused_forward.1} parent=1 // pred_region
      _
    $region57: #{fused_forward.1} parent=1 // pred_fallthru
      _
    // Predicated region
    $region58: #{fused_forward.1} parent=1 // pred_check
      _
    $region59: #{fused_forward.1} parent=1 // pred_check_branch
      %54 = sbr.rel (0) target = $region61
    $region60: #{fused_forward.1} parent=1 // pred_region
      _
    $region61: #{fused_forward.1} parent=1 // pred_fallthru
      _
    // Predicated region
    $region62: #{fused_forward.1} parent=1 // pred_check
      _
    $region63: #{fused_forward.1} parent=1 // pred_check_branch
      %56 = sbr.rel (0) target = $region65
    $region64: #{fused_forward.1} parent=1 // pred_region
      _
    $region65: #{fused_forward.1} parent=1 // pred_fallthru
      _
    // Predicated region
    $region66: #{fused_forward.1} parent=1 // pred_check
      _
    $region67: #{fused_forward.1} parent=1 // pred_check_branch
      %58 = sbr.rel (0) target = $region69
    $region68: #{fused_forward.1} parent=1 // pred_region
      _
    $region69: #{fused_forward.1} parent=1 // pred_fallthru
      _
    // Predicated region
    $region70: #{fused_forward.1} parent=1 // pred_check
      _
    $region71: #{fused_forward.1} parent=1 // pred_check_branch
      %60 = sbr.rel (0) target = $region73
    $region72: #{fused_forward.1} parent=1 // pred_region
      _
    $region73: #{fused_forward.1} parent=1 // pred_fallthru
      _
    // Predicated region
    $region74: #{fused_forward.1} parent=1 // pred_check
      _
    $region75: #{fused_forward.1} parent=1 // pred_check_branch
      %62 = sbr.rel (0) target = $region77
    $region76: #{fused_forward.1} parent=1 // pred_region
      _
    $region77: #{fused_forward.1} parent=1 // pred_fallthru
      _
    %v64 = vlaneseq
    %v65 = vand.u32 %v64, 127
    %v66 = vld [vmem:[%s0] sm:$0x3]
    %67 = vset.pattern.permute.xlu0 0
    %68 = vperm.xlu0 %67, %v66
    %v69 = vpop.permute.xlu0 %68
    %vm70 = vcmp.ge.s32.totalorder %v65, %v69
    %v71 = vld [vmem:[%s1] sm:$0x3]
    %72 = vset.pattern.permute.xlu0 0
    %73 = vperm.xlu0 %72, %v71
    %v74 = vpop.permute.xlu0 %73
    %vm75 = vcmp.lt.s32.totalorder %v65, %v74
    %vm76 = vmand %vm70, %vm75
    %v77 = vsel %vm76, 1, 0
    %v78 = vcvt.s32.f32 %v77
    %v79 = vpack.c.bf16 %v78, %v78
    %v80 = vld [vmem:[%s4] sm:$0xf]
    %v81 = vld [vmem:[%s4 + $0x4] sm:$0xf]
    %v84 = vunpack.c.l.b16 %v80
    %v85 = vunpack.c.l.b16 %v81
    %v86 = vpack.c.b16 %v85, %v84
    %vm88 = vcmask 130048
    %v90 = vsel %vm88, %v79, 0
    %92 = vmatprep.subr.bf16.mxu0 0
    %93 = vmatpush1.bf16.msra.mxu0 %v86
    %94 = vmatprep.subr.bf16.mxu0 0
    %95 = vmatpush1.bf16.msra.mxu0 0
    %96 = vmatprep.subr.bf16.mxu0 0
    %97 = vmatpush1.bf16.msra.mxu0 0
    %98 = vmatprep.subr.bf16.mxu0 0
    %99 = vmatpush1.bf16.msra.mxu0 0
    %100 = vmatprep.subr.bf16.mxu0 0
    %101 = vmatpush1.bf16.msra.mxu0 0
    %102 = vmatprep.subr.bf16.mxu0 0
    %103 = vmatpush1.bf16.msra.mxu0 0
    %104 = vmatprep.subr.bf16.mxu0 0
    %105 = vmatpush1.bf16.msra.mxu0 0
    %106 = vmatprep.subr.bf16.mxu0 0
    %107 = vmatpush1.bf16.msra.mxu0 0
    %108 = vmatprep.subr.bf16.mxu0 0
    %109 = vmatpush1.bf16.msra.mxu0 0
    %110 = vmatprep.subr.bf16.mxu0 0
    %111 = vmatpush1.bf16.msra.mxu0 0
    %112 = vmatprep.subr.bf16.mxu0 0
    %113 = vmatpush1.bf16.msra.mxu0 0
    %114 = vmatprep.subr.bf16.mxu0 0
    %115 = vmatpush1.bf16.msra.mxu0 0
    %116 = vmatprep.subr.bf16.mxu0 0
    %117 = vmatpush1.bf16.msra.mxu0 0
    %118 = vmatprep.subr.bf16.mxu0 0
    %119 = vmatpush1.bf16.msra.mxu0 0
    %120 = vmatprep.subr.bf16.mxu0 0
    %121 = vmatpush1.bf16.msra.mxu0 0
    %122 = vmatprep.subr.bf16.mxu0 0
    %123 = vmatpush1.bf16.msra.mxu0 0
    %124 = vmatprep.mubr.bf16.mxu0 0
    %125 = vmatmul.mubr.bf16.gmra.mrb[0].mxu0 %v90
    %v126 = vpop.f32.mrb[0].mxu0
    %v127 = vadd.f32 0.0, %v126
    %v128 = vpop.f32.mrb[0].mxu0
    %v129 = vpop.f32.mrb[0].mxu0
    %v130 = vpop.f32.mrb[0].mxu0
    %131 = vdwg.mxu0
    %v132 = vld [vmem:[%s2] sm:$0x3]
    %134 = vset.pattern.permute.xlu0 0
    %135 = vperm.xlu0 %134, %v132
    %v136 = vpop.permute.xlu0 %135
    %v138 = vmul.f32 %v127, %v136
    %v139 = vpack.c.bf16 %v138, %v138
    %v140 = vld [vmem:[%s7] sm:$0xf]
    %v141 = vld [vmem:[%s7 + $0x4] sm:$0xf]
    %v142 = vld [vmem:[%s7 + $0x8] sm:$0xf]
    %v143 = vld [vmem:[%s7 + $0xc] sm:$0xf]
    %v144 = vld [vmem:[%s8] sm:$0x1]
    %v146 = vlaneseq
    %v147 = vshrl.u32 %v146, 7
    %v148 = vsub.s32 0, %v147
    %v149 = vrot.slane %v144, %v148
    %v155 = vunpack.c.l.b16 %v140
    %v156 = vunpack.c.l.b16 %v141
    %v157 = vunpack.c.l.b16 %v142
    %v158 = vunpack.c.l.b16 %v143
    %v159 = vpack.c.b16 %v156, %v155
    %v160 = vpack.c.b16 %v158, %v157
    %vm163 = vcmask 261120
    %v165 = vsel %vm163, %v139, 0
    %167 = vmatprep.subr.bf16.mxu0 0
    %168 = vmatpush1.bf16.msra.mxu0 %v159
    %169 = vmatprep.subr.bf16.mxu0 0
    %170 = vmatpush1.bf16.msra.mxu0 %v160
    %171 = vmatprep.subr.bf16.mxu0 0
    %172 = vmatpush1.bf16.msra.mxu0 0
    %173 = vmatprep.subr.bf16.mxu0 0
    %174 = vmatpush1.bf16.msra.mxu0 0
    %175 = vmatprep.subr.bf16.mxu0 0
    %176 = vmatpush1.bf16.msra.mxu0 0
    %177 = vmatprep.subr.bf16.mxu0 0
    %178 = vmatpush1.bf16.msra.mxu0 0
    %179 = vmatprep.subr.bf16.mxu0 0
    %180 = vmatpush1.bf16.msra.mxu0 0
    %181 = vmatprep.subr.bf16.mxu0 0
    %182 = vmatpush1.bf16.msra.mxu0 0
    %183 = vmatprep.subr.bf16.mxu0 0
    %184 = vmatpush1.bf16.msra.mxu0 0
    %185 = vmatprep.subr.bf16.mxu0 0
    %186 = vmatpush1.bf16.msra.mxu0 0
    %187 = vmatprep.subr.bf16.mxu0 0
    %188 = vmatpush1.bf16.msra.mxu0 0
    %189 = vmatprep.subr.bf16.mxu0 0
    %190 = vmatpush1.bf16.msra.mxu0 0
    %191 = vmatprep.subr.bf16.mxu0 0
    %192 = vmatpush1.bf16.msra.mxu0 0
    %193 = vmatprep.subr.bf16.mxu0 0
    %194 = vmatpush1.bf16.msra.mxu0 0
    %195 = vmatprep.subr.bf16.mxu0 0
    %196 = vmatpush1.bf16.msra.mxu0 0
    %197 = vmatprep.subr.bf16.mxu0 0
    %198 = vmatpush1.bf16.msra.mxu0 0
    %199 = vmatprep.mubr.bf16.mxu0 0
    %200 = vmatmul.mubr.bf16.gmra.mrb[0].mxu0 %v165
    %v201 = vpop.f32.mrb[0].mxu0
    %v202 = vadd.f32 %v149, %v201
    %v203 = vpop.f32.mrb[0].mxu0
    %v204 = vpop.f32.mrb[0].mxu0
    %v205 = vpop.f32.mrb[0].mxu0
    %206 = vdwg.mxu0
    %v207 = vld [vmem:[%s3] sm:$0xf]
    %v208 = vld [vmem:[%s5] sm:$0xf]
    %v209 = vld [vmem:[%s5 + $0x4] sm:$0xf]
    %v210 = vld [vmem:[%s5 + $0x8] sm:$0xf]
    %v211 = vld [vmem:[%s5 + $0xc] sm:$0xf]
    %v212 = vld [vmem:[%s5 + $0x10] sm:$0xf]
    %v213 = vld [vmem:[%s5 + $0x14] sm:$0xf]
    %v214 = vld [vmem:[%s5 + $0x18] sm:$0xf]
    %v215 = vld [vmem:[%s5 + $0x1c] sm:$0xf]
    %v216 = vld [vmem:[%s5 + $0x20] sm:$0xf]
    %v217 = vld [vmem:[%s5 + $0x24] sm:$0xf]
    %v218 = vld [vmem:[%s5 + $0x28] sm:$0xf]
    %v219 = vld [vmem:[%s5 + $0x2c] sm:$0xf]
    %v220 = vld [vmem:[%s5 + $0x30] sm:$0xf]
    %v221 = vld [vmem:[%s5 + $0x34] sm:$0xf]
    %v222 = vld [vmem:[%s5 + $0x38] sm:$0xf]
    %v223 = vld [vmem:[%s5 + $0x3c] sm:$0xf]
    %v224 = vld [vmem:[%s5 + $0x40] sm:$0xf]
    %v225 = vld [vmem:[%s5 + $0x44] sm:$0xf]
    %v226 = vld [vmem:[%s5 + $0x48] sm:$0xf]
    %v227 = vld [vmem:[%s5 + $0x4c] sm:$0xf]
    %v228 = vld [vmem:[%s5 + $0x50] sm:$0xf]
    %v229 = vld [vmem:[%s5 + $0x54] sm:$0xf]
    %v230 = vld [vmem:[%s5 + $0x58] sm:$0xf]
    %v231 = vld [vmem:[%s5 + $0x5c] sm:$0xf]
    %v232 = vld [vmem:[%s5 + $0x60] sm:$0xf]
    %v233 = vld [vmem:[%s5 + $0x64] sm:$0xf]
    %v234 = vld [vmem:[%s5 + $0x68] sm:$0xf]
    %v235 = vld [vmem:[%s5 + $0x6c] sm:$0xf]
    %v236 = vld [vmem:[%s5 + $0x70] sm:$0xf]
    %v237 = vld [vmem:[%s5 + $0x74] sm:$0xf]
    %v238 = vld [vmem:[%s5 + $0x78] sm:$0xf]
    %v239 = vld [vmem:[%s5 + $0x7c] sm:$0xf]
    %v240 = vld [vmem:[%s5 + $0x80] sm:$0xf]
    %v241 = vld [vmem:[%s5 + $0x84] sm:$0xf]
    %v242 = vld [vmem:[%s5 + $0x88] sm:$0xf]
    %v243 = vld [vmem:[%s5 + $0x8c] sm:$0xf]
    %v244 = vld [vmem:[%s5 + $0x90] sm:$0xf]
    %v245 = vld [vmem:[%s5 + $0x94] sm:$0xf]
    %v246 = vld [vmem:[%s5 + $0x98] sm:$0xf]
    %v247 = vld [vmem:[%s5 + $0x9c] sm:$0xf]
    %v248 = vld [vmem:[%s5 + $0xa0] sm:$0xf]
    %v249 = vld [vmem:[%s5 + $0xa4] sm:$0xf]
    %v250 = vld [vmem:[%s5 + $0xa8] sm:$0xf]
    %v251 = vld [vmem:[%s5 + $0xac] sm:$0xf]
    %v252 = vld [vmem:[%s5 + $0xb0] sm:$0xf]
    %v253 = vld [vmem:[%s5 + $0xb4] sm:$0xf]
    %v254 = vld [vmem:[%s5 + $0xb8] sm:$0xf]
    %v255 = vld [vmem:[%s5 + $0xbc] sm:$0xf]
    %v256 = vld [vmem:[%s5 + $0xc0] sm:$0xf]
    %v257 = vld [vmem:[%s5 + $0xc4] sm:$0xf]
    %v258 = vld [vmem:[%s5 + $0xc8] sm:$0xf]
    %v259 = vld [vmem:[%s5 + $0xcc] sm:$0xf]
    %v260 = vld [vmem:[%s5 + $0xd0] sm:$0xf]
    %v261 = vld [vmem:[%s5 + $0xd4] sm:$0xf]
    %v262 = vld [vmem:[%s5 + $0xd8] sm:$0xf]
    %v263 = vld [vmem:[%s5 + $0xdc] sm:$0xf]
    %v264 = vld [vmem:[%s5 + $0xe0] sm:$0xf]
    %v265 = vld [vmem:[%s5 + $0xe4] sm:$0xf]
    %v266 = vld [vmem:[%s5 + $0xe8] sm:$0xf]
    %v267 = vld [vmem:[%s5 + $0xec] sm:$0xf]
    %v268 = vld [vmem:[%s6] sm:$0x1]
    %v270 = vlaneseq
    %v271 = vshrl.u32 %v270, 7
    %v272 = vsub.s32 0, %v271
    %v273 = vrot.slane %v268, %v272
    %v277 = vunpack.c.l.s4 1966171168
    %v278 = vunpack.c.0.s8 %v277
    %v279 = vlaneseq
    %v280 = vshrl.u32 %v279, 7
    %v281 = vsub.s32 %v278, %v280
    %v282 = vrot.slane %v207, %v281
    %v283 = vcombine.high %v282, %v282
    %v285 = vunpack.c.l.s4 1966171168
    %v286 = vunpack.c.0.s8 %v285
    %v287 = vlaneseq
    %v288 = vshrl.u32 %v287, 7
    %v289 = vsub.s32 %v286, %v288
    %v290 = vrot.slane %v282, %v289
    %v292 = vunpack.c.l.s4 1966171168
    %v293 = vunpack.c.0.s8 %v292
    %v294 = vlaneseq
    %v295 = vshrl.u32 %v294, 7
    %v296 = vsub.s32 %v293, %v295
    %v297 = vrot.slane %v283, %v296
    %v298 = vcombine.high %v290, %v290
    %v299 = vcombine.high %v297, %v297
    %v363 = vunpack.c.l.b16 %v208
    %v364 = vunpack.c.l.b16 %v209
    %v365 = vunpack.c.l.b16 %v210
    %v366 = vunpack.c.l.b16 %v211
    %v367 = vunpack.c.l.b16 %v212
    %v368 = vunpack.c.l.b16 %v213
    %v369 = vunpack.c.l.b16 %v214
    %v370 = vunpack.c.l.b16 %v215
    %v371 = vunpack.c.l.b16 %v216
    %v372 = vunpack.c.l.b16 %v217
    %v373 = vunpack.c.l.b16 %v218
    %v374 = vunpack.c.l.b16 %v219
    %v375 = vunpack.c.l.b16 %v220
    %v376 = vunpack.c.l.b16 %v221
    %v377 = vunpack.c.l.b16 %v222
    %v378 = vunpack.c.l.b16 %v223
    %v379 = vunpack.c.l.b16 %v224
    %v380 = vunpack.c.l.b16 %v225
    %v381 = vunpack.c.l.b16 %v226
    %v382 = vunpack.c.l.b16 %v227
    %v383 = vunpack.c.l.b16 %v228
    %v384 = vunpack.c.l.b16 %v229
    %v385 = vunpack.c.l.b16 %v230
    %v386 = vunpack.c.l.b16 %v231
    %v387 = vunpack.c.l.b16 %v232
    %v388 = vunpack.c.l.b16 %v233
    %v389 = vunpack.c.l.b16 %v234
    %v390 = vunpack.c.l.b16 %v235
    %v391 = vunpack.c.l.b16 %v236
    %v392 = vunpack.c.l.b16 %v237
    %v393 = vunpack.c.l.b16 %v238
    %v394 = vunpack.c.l.b16 %v239
    %v395 = vunpack.c.l.b16 %v240
    %v396 = vunpack.c.l.b16 %v241
    %v397 = vunpack.c.l.b16 %v242
    %v398 = vunpack.c.l.b16 %v243
    %v399 = vunpack.c.l.b16 %v244
    %v400 = vunpack.c.l.b16 %v245
    %v401 = vunpack.c.l.b16 %v246
    %v402 = vunpack.c.l.b16 %v247
    %v403 = vunpack.c.l.b16 %v248
    %v404 = vunpack.c.l.b16 %v249
    %v405 = vunpack.c.l.b16 %v250
    %v406 = vunpack.c.l.b16 %v251
    %v407 = vunpack.c.l.b16 %v252
    %v408 = vunpack.c.l.b16 %v253
    %v409 = vunpack.c.l.b16 %v254
    %v410 = vunpack.c.l.b16 %v255
    %v411 = vunpack.c.l.b16 %v256
    %v412 = vunpack.c.l.b16 %v257
    %v413 = vunpack.c.l.b16 %v258
    %v414 = vunpack.c.l.b16 %v259
    %v415 = vunpack.c.l.b16 %v260
    %v416 = vunpack.c.l.b16 %v261
    %v417 = vunpack.c.l.b16 %v262
    %v418 = vunpack.c.l.b16 %v263
    %v419 = vunpack.c.l.b16 %v264
    %v420 = vunpack.c.l.b16 %v265
    %v421 = vunpack.c.l.b16 %v266
    %v422 = vunpack.c.l.b16 %v267
    %v423 = vpack.c.b16 %v364, %v363
    %v424 = vpack.c.b16 %v366, %v365
    %v425 = vpack.c.b16 %v368, %v367
    %v426 = vpack.c.b16 %v370, %v369
    %v427 = vpack.c.b16 %v372, %v371
    %v428 = vpack.c.b16 %v374, %v373
    %v429 = vpack.c.b16 %v376, %v375
    %v430 = vpack.c.b16 %v378, %v377
    %v431 = vpack.c.b16 %v380, %v379
    %v432 = vpack.c.b16 %v382, %v381
    %v433 = vpack.c.b16 %v384, %v383
    %v434 = vpack.c.b16 %v386, %v385
    %v435 = vpack.c.b16 %v388, %v387
    %v436 = vpack.c.b16 %v390, %v389
    %v437 = vpack.c.b16 %v392, %v391
    %v438 = vpack.c.b16 %v394, %v393
    %v439 = vpack.c.b16 %v396, %v395
    %v440 = vpack.c.b16 %v398, %v397
    %v441 = vpack.c.b16 %v400, %v399
    %v442 = vpack.c.b16 %v402, %v401
    %v443 = vpack.c.b16 %v404, %v403
    %v444 = vpack.c.b16 %v406, %v405
    %v445 = vpack.c.b16 %v408, %v407
    %v446 = vpack.c.b16 %v410, %v409
    %v447 = vpack.c.b16 %v412, %v411
    %v448 = vpack.c.b16 %v414, %v413
    %v449 = vpack.c.b16 %v416, %v415
    %v450 = vpack.c.b16 %v418, %v417
    %v451 = vpack.c.b16 %v420, %v419
    %v452 = vpack.c.b16 %v422, %v421
    %vm483 = vcmask 785408
    %v485 = vsel %vm483, %v299, 0
    %487 = vmatprep.subr.bf16.mxu0 0
    %488 = vmatpush1.bf16.msra.mxu0 %v423
    %489 = vmatprep.subr.bf16.mxu0 0
    %490 = vmatpush1.bf16.msra.mxu0 %v424
    %491 = vmatprep.subr.bf16.mxu0 0
    %492 = vmatpush1.bf16.msra.mxu0 %v425
    %493 = vmatprep.subr.bf16.mxu0 0
    %494 = vmatpush1.bf16.msra.mxu0 %v426
    %495 = vmatprep.subr.bf16.mxu0 0
    %496 = vmatpush1.bf16.msra.mxu0 %v427
    %497 = vmatprep.subr.bf16.mxu0 0
    %498 = vmatpush1.bf16.msra.mxu0 %v428
    %499 = vmatprep.subr.bf16.mxu0 0
    %500 = vmatpush1.bf16.msra.mxu0 %v429
    %501 = vmatprep.subr.bf16.mxu0 0
    %502 = vmatpush1.bf16.msra.mxu0 %v430
    %503 = vmatprep.subr.bf16.mxu0 0
    %504 = vmatpush1.bf16.msra.mxu0 %v431
    %505 = vmatprep.subr.bf16.mxu0 0
    %506 = vmatpush1.bf16.msra.mxu0 %v432
    %507 = vmatprep.subr.bf16.mxu0 0
    %508 = vmatpush1.bf16.msra.mxu0 %v433
    %509 = vmatprep.subr.bf16.mxu0 0
    %510 = vmatpush1.bf16.msra.mxu0 %v434
    %511 = vmatprep.subr.bf16.mxu0 0
    %512 = vmatpush1.bf16.msra.mxu0 %v435
    %513 = vmatprep.subr.bf16.mxu0 0
    %514 = vmatpush1.bf16.msra.mxu0 %v436
    %515 = vmatprep.subr.bf16.mxu0 0
    %516 = vmatpush1.bf16.msra.mxu0 %v437
    %517 = vmatprep.subr.bf16.mxu0 0
    %518 = vmatpush1.bf16.msra.mxu0 %v438
    %519 = vmatprep.mubr.bf16.mxu0 %v297
    %520 = vmatmul.mubr.bf16.gmra.mrb[0].mxu0 %v290
    %v521 = vpop.f32.mrb[0].mxu0
    %v522 = vadd.f32 %v273, %v521
    %v523 = vpop.f32.mrb[0].mxu0
    %v524 = vpop.f32.mrb[0].mxu0
    %v525 = vpop.f32.mrb[0].mxu0
    %526 = vdwg.mxu0
    %527 = vmatprep.subr.bf16.mxu0 0
    %528 = vmatpush1.bf16.msra.mxu0 %v439
    %529 = vmatprep.subr.bf16.mxu0 0
    %530 = vmatpush1.bf16.msra.mxu0 %v440
    %531 = vmatprep.subr.bf16.mxu0 0
    %532 = vmatpush1.bf16.msra.mxu0 %v441
    %533 = vmatprep.subr.bf16.mxu0 0
    %534 = vmatpush1.bf16.msra.mxu0 %v442
    %535 = vmatprep.subr.bf16.mxu0 0
    %536 = vmatpush1.bf16.msra.mxu0 %v443
    %537 = vmatprep.subr.bf16.mxu0 0
    %538 = vmatpush1.bf16.msra.mxu0 %v444
    %539 = vmatprep.subr.bf16.mxu0 0
    %540 = vmatpush1.bf16.msra.mxu0 %v445
    %541 = vmatprep.subr.bf16.mxu0 0
    %542 = vmatpush1.bf16.msra.mxu0 %v446
    %543 = vmatprep.subr.bf16.mxu0 0
    %544 = vmatpush1.bf16.msra.mxu0 %v447
    %545 = vmatprep.subr.bf16.mxu0 0
    %546 = vmatpush1.bf16.msra.mxu0 %v448
    %547 = vmatprep.subr.bf16.mxu0 0
    %548 = vmatpush1.bf16.msra.mxu0 %v449
    %549 = vmatprep.subr.bf16.mxu0 0
    %550 = vmatpush1.bf16.msra.mxu0 %v450
    %551 = vmatprep.subr.bf16.mxu0 0
    %552 = vmatpush1.bf16.msra.mxu0 %v451
    %553 = vmatprep.subr.bf16.mxu0 0
    %554 = vmatpush1.bf16.msra.mxu0 %v452
    %555 = vmatprep.subr.bf16.mxu0 0
    %556 = vmatpush1.bf16.msra.mxu0 0
    %557 = vmatprep.subr.bf16.mxu0 0
    %558 = vmatpush1.bf16.msra.mxu0 0
    %559 = vmatprep.mubr.bf16.mxu0 %v485
    %560 = vmatmul.mubr.bf16.gmra.mrb[0].mxu0 %v298
    %v561 = vpop.f32.mrb[0].mxu0
    %v562 = vadd.f32 %v522, %v561
    %v563 = vpop.f32.mrb[0].mxu0
    %v564 = vpop.f32.mrb[0].mxu0
    %v565 = vpop.f32.mrb[0].mxu0
    %566 = vdwg.mxu0
    %v567 = vpack.c.bf16 %v562, %v562
    %v568 = vld [vmem:[%s9] sm:$0xf]
    %v569 = vld [vmem:[%s9 + $0x4] sm:$0xf]
    %v570 = vld [vmem:[%s9 + $0x8] sm:$0xf]
    %v571 = vld [vmem:[%s9 + $0xc] sm:$0xf]
    %v572 = vpack.c.bf16 %v202, %v202
    %v573 = vld [vmem:[%s9 + $0x10] sm:$0xf]
    %v574 = vld [vmem:[%s9 + $0x14] sm:$0xf]
    %v575 = vld [vmem:[%s9 + $0x18] sm:$0xf]
    %v576 = vld [vmem:[%s9 + $0x1c] sm:$0xf]
    %v581 = vunpack.c.l.b16 %v573
    %v582 = vunpack.c.l.b16 %v574
    %v583 = vunpack.c.l.b16 %v575
    %v584 = vunpack.c.l.b16 %v576
    %v585 = vpack.c.b16 %v582, %v581
    %v586 = vpack.c.b16 %v584, %v583
    %v590 = vsel %vm163, %v572, 0
    %592 = vmatprep.subr.bf16.mxu0 0
    %593 = vmatpush1.bf16.msra.mxu0 %v585
    %594 = vmatprep.subr.bf16.mxu0 0
    %595 = vmatpush1.bf16.msra.mxu0 %v586
    %596 = vmatprep.subr.bf16.mxu0 0
    %597 = vmatpush1.bf16.msra.mxu0 0
    %598 = vmatprep.subr.bf16.mxu0 0
    %599 = vmatpush1.bf16.msra.mxu0 0
    %600 = vmatprep.subr.bf16.mxu0 0
    %601 = vmatpush1.bf16.msra.mxu0 0
    %602 = vmatprep.subr.bf16.mxu0 0
    %603 = vmatpush1.bf16.msra.mxu0 0
    %604 = vmatprep.subr.bf16.mxu0 0
    %605 = vmatpush1.bf16.msra.mxu0 0
    %606 = vmatprep.subr.bf16.mxu0 0
    %607 = vmatpush1.bf16.msra.mxu0 0
    %608 = vmatprep.subr.bf16.mxu0 0
    %609 = vmatpush1.bf16.msra.mxu0 0
    %610 = vmatprep.subr.bf16.mxu0 0
    %611 = vmatpush1.bf16.msra.mxu0 0
    %612 = vmatprep.subr.bf16.mxu0 0
    %613 = vmatpush1.bf16.msra.mxu0 0
    %614 = vmatprep.subr.bf16.mxu0 0
    %615 = vmatpush1.bf16.msra.mxu0 0
    %616 = vmatprep.subr.bf16.mxu0 0
    %617 = vmatpush1.bf16.msra.mxu0 0
    %618 = vmatprep.subr.bf16.mxu0 0
    %619 = vmatpush1.bf16.msra.mxu0 0
    %620 = vmatprep.subr.bf16.mxu0 0
    %621 = vmatpush1.bf16.msra.mxu0 0
    %622 = vmatprep.subr.bf16.mxu0 0
    %623 = vmatpush1.bf16.msra.mxu0 0
    %624 = vmatprep.mubr.bf16.mxu0 0
    %625 = vmatmul.mubr.bf16.gmra.mrb[0].mxu0 %v590
    %v626 = vpop.f32.mrb[0].mxu0
    %v627 = vadd.f32 0.0, %v626
    %v628 = vpop.f32.mrb[0].mxu0
    %v629 = vpop.f32.mrb[0].mxu0
    %v630 = vpop.f32.mrb[0].mxu0
    %631 = vdwg.mxu0
    %v636 = vunpack.c.l.b16 %v568
    %v637 = vunpack.c.l.b16 %v569
    %v638 = vunpack.c.l.b16 %v570
    %v639 = vunpack.c.l.b16 %v571
    %v640 = vpack.c.b16 %v637, %v636
    %v641 = vpack.c.b16 %v639, %v638
    %v645 = vsel %vm163, %v567, 0
    %647 = vmatprep.subr.bf16.mxu0 0
    %648 = vmatpush1.bf16.msra.mxu0 %v640
    %649 = vmatprep.subr.bf16.mxu0 0
    %650 = vmatpush1.bf16.msra.mxu0 %v641
    %651 = vmatprep.subr.bf16.mxu0 0
    %652 = vmatpush1.bf16.msra.mxu0 0
    %653 = vmatprep.subr.bf16.mxu0 0
    %654 = vmatpush1.bf16.msra.mxu0 0
    %655 = vmatprep.subr.bf16.mxu0 0
    %656 = vmatpush1.bf16.msra.mxu0 0
    %657 = vmatprep.subr.bf16.mxu0 0
    %658 = vmatpush1.bf16.msra.mxu0 0
    %659 = vmatprep.subr.bf16.mxu0 0
    %660 = vmatpush1.bf16.msra.mxu0 0
    %661 = vmatprep.subr.bf16.mxu0 0
    %662 = vmatpush1.bf16.msra.mxu0 0
    %663 = vmatprep.subr.bf16.mxu0 0
    %664 = vmatpush1.bf16.msra.mxu0 0
    %665 = vmatprep.subr.bf16.mxu0 0
    %666 = vmatpush1.bf16.msra.mxu0 0
    %667 = vmatprep.subr.bf16.mxu0 0
    %668 = vmatpush1.bf16.msra.mxu0 0
    %669 = vmatprep.subr.bf16.mxu0 0
    %670 = vmatpush1.bf16.msra.mxu0 0
    %671 = vmatprep.subr.bf16.mxu0 0
    %672 = vmatpush1.bf16.msra.mxu0 0
    %673 = vmatprep.subr.bf16.mxu0 0
    %674 = vmatpush1.bf16.msra.mxu0 0
    %675 = vmatprep.subr.bf16.mxu0 0
    %676 = vmatpush1.bf16.msra.mxu0 0
    %677 = vmatprep.subr.bf16.mxu0 0
    %678 = vmatpush1.bf16.msra.mxu0 0
    %679 = vmatprep.mubr.bf16.mxu0 0
    %680 = vmatmul.mubr.bf16.gmra.mrb[0].mxu0 %v645
    %v681 = vpop.f32.mrb[0].mxu0
    %v682 = vadd.f32 %v627, %v681
    %v683 = vpop.f32.mrb[0].mxu0
    %v684 = vpop.f32.mrb[0].mxu0
    %v685 = vpop.f32.mrb[0].mxu0
    %686 = vdwg.mxu0
    %v687 = vld [vmem:[%s10] sm:$0x1]
    %v689 = vlaneseq
    %v690 = vshrl.u32 %v689, 7
    %v691 = vsub.s32 0, %v690
    %v692 = vrot.slane %v687, %v691
    %v694 = vadd.f32 %v682, %v692
    %vm695 = vcmp.ge.f32.partialorder %v694, 0.0
    %v696 = vmul.f32 %v694, 0.01
    %v697 = vsel %vm695, %v694, %v696
    %vm698 = vcmask 517120
    %v699 = vsel %vm698, %v697, 0.0
    %700 = vadd.xlane.f32.xlu0 %v699
    %v701 = vpop.xlane.xlu0 %700
    %v702 = vrcp.pop 64.0
    %v703 = vmul.f32 %v701, %v702
    %v704 = vsub.f32 %v697, %v703
    %v705 = vmul.f32 %v704, %v704
    %v706 = vsel %vm698, %v705, 0.0
    %707 = vadd.xlane.f32.xlu0 %v706
    %v708 = vpop.xlane.xlu0 %707
    %v709 = vmul.f32 %v708, %v702
    %v710 = vadd.f32 %v709, 1e-05
    %v711 = vrsqrt.pop %v710
    %v712 = vmul.f32 %v704, %v711
    %v713 = vld [vmem:[%s11] sm:$0x1]
    %v715 = vlaneseq
    %v716 = vshrl.u32 %v715, 7
    %v717 = vsub.s32 0, %v716
    %v718 = vrot.slane %v713, %v717
    %v720 = vmul.f32 %v712, %v718
    %v721 = vld [vmem:[%s12] sm:$0x1]
    %v723 = vlaneseq
    %v724 = vshrl.u32 %v723, 7
    %v725 = vsub.s32 0, %v724
    %v726 = vrot.slane %v721, %v725
    %v728 = vadd.f32 %v720, %v726
    %v729 = vpack.c.bf16 %v728, %v728
    %v730 = vld [vmem:[%s13] sm:$0xf]
    %v731 = vld [vmem:[%s13 + $0x4] sm:$0xf]
    %v732 = vld [vmem:[%s13 + $0x8] sm:$0xf]
    %v733 = vld [vmem:[%s13 + $0xc] sm:$0xf]
    %v734 = vld [vmem:[%s13 + $0x10] sm:$0xf]
    %v735 = vld [vmem:[%s13 + $0x14] sm:$0xf]
    %v736 = vld [vmem:[%s13 + $0x18] sm:$0xf]
    %v737 = vld [vmem:[%s13 + $0x1c] sm:$0xf]
    %v738 = vld [vmem:[%s14] sm:$0x1]
    %v740 = vlaneseq
    %v741 = vshrl.u32 %v740, 7
    %v742 = vsub.s32 0, %v741
    %v743 = vrot.slane %v738, %v742
    %v753 = vunpack.c.l.b16 %v730
    %v754 = vunpack.c.l.b16 %v731
    %v755 = vunpack.c.l.b16 %v732
    %v756 = vunpack.c.l.b16 %v733
    %v757 = vunpack.c.l.b16 %v734
    %v758 = vunpack.c.l.b16 %v735
    %v759 = vunpack.c.l.b16 %v736
    %v760 = vunpack.c.l.b16 %v737
    %v761 = vpack.c.b16 %v754, %v753
    %v762 = vpack.c.b16 %v756, %v755
    %v763 = vpack.c.b16 %v758, %v757
    %v764 = vpack.c.b16 %v760, %v759
    %vm769 = vcmask 523264
    %v771 = vsel %vm769, %v729, 0
    %773 = vmatprep.subr.bf16.mxu0 0
    %774 = vmatpush1.bf16.msra.mxu0 %v761
    %775 = vmatprep.subr.bf16.mxu0 0
    %776 = vmatpush1.bf16.msra.mxu0 %v762
    %777 = vmatprep.subr.bf16.mxu0 0
    %778 = vmatpush1.bf16.msra.mxu0 %v763
    %779 = vmatprep.subr.bf16.mxu0 0
    %780 = vmatpush1.bf16.msra.mxu0 %v764
    %781 = vmatprep.subr.bf16.mxu0 0
    %782 = vmatpush1.bf16.msra.mxu0 0
    %783 = vmatprep.subr.bf16.mxu0 0
    %784 = vmatpush1.bf16.msra.mxu0 0
    %785 = vmatprep.subr.bf16.mxu0 0
    %786 = vmatpush1.bf16.msra.mxu0 0
    %787 = vmatprep.subr.bf16.mxu0 0
    %788 = vmatpush1.bf16.msra.mxu0 0
    %789 = vmatprep.subr.bf16.mxu0 0
    %790 = vmatpush1.bf16.msra.mxu0 0
    %791 = vmatprep.subr.bf16.mxu0 0
    %792 = vmatpush1.bf16.msra.mxu0 0
    %793 = vmatprep.subr.bf16.mxu0 0
    %794 = vmatpush1.bf16.msra.mxu0 0
    %795 = vmatprep.subr.bf16.mxu0 0
    %796 = vmatpush1.bf16.msra.mxu0 0
    %797 = vmatprep.subr.bf16.mxu0 0
    %798 = vmatpush1.bf16.msra.mxu0 0
    %799 = vmatprep.subr.bf16.mxu0 0
    %800 = vmatpush1.bf16.msra.mxu0 0
    %801 = vmatprep.subr.bf16.mxu0 0
    %802 = vmatpush1.bf16.msra.mxu0 0
    %803 = vmatprep.subr.bf16.mxu0 0
    %804 = vmatpush1.bf16.msra.mxu0 0
    %805 = vmatprep.mubr.bf16.mxu0 0
    %806 = vmatmul.mubr.bf16.gmra.mrb[0].mxu0 %v771
    %v807 = vpop.f32.mrb[0].mxu0
    %v808 = vadd.f32 %v743, %v807
    %v809 = vpop.f32.mrb[0].mxu0
    %v810 = vpop.f32.mrb[0].mxu0
    %v811 = vpop.f32.mrb[0].mxu0
    %812 = vdwg.mxu0
    %vm813 = vcmp.ge.f32.partialorder %v808, 0.0
    %v814 = vmul.f32 %v808, 0.01
    %v815 = vsel %vm813, %v808, %v814
    %v816 = vsel %vm698, %v815, 0.0
    %817 = vadd.xlane.f32.xlu0 %v816
    %v818 = vpop.xlane.xlu0 %817
    %v819 = vmul.f32 %v818, %v702
    %v820 = vsub.f32 %v815, %v819
    %v821 = vmul.f32 %v820, %v820
    %v822 = vsel %vm698, %v821, 0.0
    %823 = vadd.xlane.f32.xlu0 %v822
    %v824 = vpop.xlane.xlu0 %823
    %v825 = vmul.f32 %v824, %v702
    %v826 = vadd.f32 %v825, 1e-05
    %v827 = vrsqrt.pop %v826
    %v828 = vmul.f32 %v820, %v827
    %v829 = vld [vmem:[%s15] sm:$0x1]
    %v831 = vlaneseq
    %v832 = vshrl.u32 %v831, 7
    %v833 = vsub.s32 0, %v832
    %v834 = vrot.slane %v829, %v833
    %v836 = vmul.f32 %v828, %v834
    %v837 = vld [vmem:[%s16] sm:$0x1]
    %v839 = vlaneseq
    %v840 = vshrl.u32 %v839, 7
    %v841 = vsub.s32 0, %v840
    %v842 = vrot.slane %v837, %v841
    %v844 = vadd.f32 %v836, %v842
    %v845 = vpack.c.bf16 %v844, %v844
    %v846 = vld [vmem:[%s17] sm:$0xf]
    %v847 = vld [vmem:[%s17 + $0x4] sm:$0xf]
    %v848 = vld [vmem:[%s17 + $0x8] sm:$0xf]
    %v849 = vld [vmem:[%s17 + $0xc] sm:$0xf]
    %v850 = vld [vmem:[%s17 + $0x10] sm:$0xf]
    %v851 = vld [vmem:[%s17 + $0x14] sm:$0xf]
    %v852 = vld [vmem:[%s17 + $0x18] sm:$0xf]
    %v853 = vld [vmem:[%s17 + $0x1c] sm:$0xf]
    %v854 = vld [vmem:[%s18] sm:$0x1]
    %v856 = vlaneseq
    %v857 = vshrl.u32 %v856, 7
    %v858 = vsub.s32 0, %v857
    %v859 = vrot.slane %v854, %v858
    %v869 = vunpack.c.l.b16 %v846
    %v870 = vunpack.c.l.b16 %v847
    %v871 = vunpack.c.l.b16 %v848
    %v872 = vunpack.c.l.b16 %v849
    %v873 = vunpack.c.l.b16 %v850
    %v874 = vunpack.c.l.b16 %v851
    %v875 = vunpack.c.l.b16 %v852
    %v876 = vunpack.c.l.b16 %v853
    %v877 = vpack.c.b16 %v870, %v869
    %v878 = vpack.c.b16 %v872, %v871
    %v879 = vpack.c.b16 %v874, %v873
    %v880 = vpack.c.b16 %v876, %v875
    %v886 = vsel %vm769, %v845, 0
    %888 = vmatprep.subr.bf16.mxu0 0
    %889 = vmatpush1.bf16.msra.mxu0 %v877
    %890 = vmatprep.subr.bf16.mxu0 0
    %891 = vmatpush1.bf16.msra.mxu0 %v878
    %892 = vmatprep.subr.bf16.mxu0 0
    %893 = vmatpush1.bf16.msra.mxu0 %v879
    %894 = vmatprep.subr.bf16.mxu0 0
    %895 = vmatpush1.bf16.msra.mxu0 %v880
    %896 = vmatprep.subr.bf16.mxu0 0
    %897 = vmatpush1.bf16.msra.mxu0 0
    %898 = vmatprep.subr.bf16.mxu0 0
    %899 = vmatpush1.bf16.msra.mxu0 0
    %900 = vmatprep.subr.bf16.mxu0 0
    %901 = vmatpush1.bf16.msra.mxu0 0
    %902 = vmatprep.subr.bf16.mxu0 0
    %903 = vmatpush1.bf16.msra.mxu0 0
    %904 = vmatprep.subr.bf16.mxu0 0
    %905 = vmatpush1.bf16.msra.mxu0 0
    %906 = vmatprep.subr.bf16.mxu0 0
    %907 = vmatpush1.bf16.msra.mxu0 0
    %908 = vmatprep.subr.bf16.mxu0 0
    %909 = vmatpush1.bf16.msra.mxu0 0
    %910 = vmatprep.subr.bf16.mxu0 0
    %911 = vmatpush1.bf16.msra.mxu0 0
    %912 = vmatprep.subr.bf16.mxu0 0
    %913 = vmatpush1.bf16.msra.mxu0 0
    %914 = vmatprep.subr.bf16.mxu0 0
    %915 = vmatpush1.bf16.msra.mxu0 0
    %916 = vmatprep.subr.bf16.mxu0 0
    %917 = vmatpush1.bf16.msra.mxu0 0
    %918 = vmatprep.subr.bf16.mxu0 0
    %919 = vmatpush1.bf16.msra.mxu0 0
    %920 = vmatprep.mubr.bf16.mxu0 0
    %921 = vmatmul.mubr.bf16.gmra.mrb[0].mxu0 %v886
    %v922 = vpop.f32.mrb[0].mxu0
    %v923 = vadd.f32 %v859, %v922
    %v924 = vpop.f32.mrb[0].mxu0
    %v925 = vpop.f32.mrb[0].mxu0
    %v926 = vpop.f32.mrb[0].mxu0
    %927 = vdwg.mxu0
    %vm928 = vcmask 123904
    %929 = vst.msk [vmem:[#allocation2] sm:$0x3] %vm928, %v923
    // Predicated region
    $region78: #{fused_forward.1} parent=1 // pred_check
      _
    $region79: #{fused_forward.1} parent=1 // pred_check_branch
      %931 = sbr.rel (0) target = $region81
    $region80: #{fused_forward.1} parent=1 // pred_region
      %s933 = ssub.s32 32, 32
      %934 = vsyncadd [#allocation3], %s933
      %s936 = sshll.u32 [#allocation2], 4
      %s937 = int_to_ptr.vmem [resolvable:$true] %s936
      %939 = dma.vmem_to_hbm [thread:$0]  %s937, 32, %s19, [#allocation3]
    $region81: #{fused_forward.1} parent=1 // pred_fallthru
      _
    // Predicated region
    $region82: #{fused_forward.1} parent=1 // pred_check
      _
    $region83: #{fused_forward.1} parent=1 // pred_check_branch
      %941 = sbr.rel (0) target = $region85
    $region84: #{fused_forward.1} parent=1 // pred_region
      %942 = dma.done [#allocation3], 32
    $region85: #{fused_forward.1} parent=1 // pred_fallthru
      _
    %943 = vsyncpa [#allocation3], 1

</llo_original>
